<compile_context>
chip_gen: v5e
topology: v5e:2x2
jax: 0.10.0
libtpu: 0.0.40
codegen_flags: <defaults>
</compile_context>

<pallas_src>
import functools

import jax
import jax.numpy as jnp
from jax import lax
from jax.experimental import pallas as pl
from jax.experimental.pallas import tpu as pltpu


ACT_DTYPE = jnp.bfloat16          # residual-stream / activation storage dtype
VMEM_LIMIT = 32 * 1024 * 1024     # explicit scoped-VMEM budget (safe on v5e/v6e/v7x)


def _fit_tile(dim, target):
    """Largest convenient tile: full dim if small, `target` if it divides, else full dim."""
    if dim <= target:
        return dim
    return target if dim % target == 0 else dim


# ---------------------------------------------------------------------------
# Tiled linear (+ bias, + optional GELU) with K-reduction accumulator
# ---------------------------------------------------------------------------

def _linear_kernel(x_ref, w_ref, b_ref, o_ref, acc_ref, *, activation):
    k = pl.program_id(2)

    @pl.when(k == 0)
    def _():
        acc_ref[...] = jnp.zeros_like(acc_ref)

    acc_ref[...] += jnp.dot(
        x_ref[...].astype(jnp.bfloat16),
        w_ref[...].astype(jnp.bfloat16),
        preferred_element_type=jnp.float32,
    )

    @pl.when(k == pl.num_programs(2) - 1)
    def _():
        y = acc_ref[...] + b_ref[...].astype(jnp.float32)
        if activation == "gelu":
            # tanh-approx GELU (synthetic encoder; exact-erf GELU differs negligibly)
            y = jax.nn.gelu(y, approximate=True)
        o_ref[...] = y.astype(o_ref.dtype)


def linear(x, w, b, activation=None, out_dtype=ACT_DTYPE):
    M, K = x.shape
    N = w.shape[1]
    tm = _fit_tile(M, 256)
    tn = _fit_tile(N, 256)
    tk = _fit_tile(K, 512)
    grid = (M // tm, N // tn, K // tk)
    cost = pl.CostEstimate(
        flops=2 * M * N * K,
        transcendentals=(M * N if activation == "gelu" else 0),
        bytes_accessed=int((M * K + K * N) * 2 + M * N * jnp.dtype(out_dtype).itemsize + N * 4),
    )
    return pl.pallas_call(
        functools.partial(_linear_kernel, activation=activation),
        out_shape=jax.ShapeDtypeStruct((M, N), out_dtype),
        grid=grid,
        in_specs=[
            pl.BlockSpec((tm, tk), lambda i, j, k: (i, k)),
            pl.BlockSpec((tk, tn), lambda i, j, k: (k, j)),
            pl.BlockSpec((1, tn), lambda i, j, k: (0, j)),
        ],
        out_specs=pl.BlockSpec((tm, tn), lambda i, j, k: (i, j)),
        scratch_shapes=[pltpu.VMEM((tm, tn), jnp.float32)],
        compiler_params=pltpu.CompilerParams(
            dimension_semantics=("parallel", "parallel", "arbitrary"),
            vmem_limit_bytes=VMEM_LIMIT),
        cost_estimate=cost,
    )(x, w, b.reshape(1, N))


# ---------------------------------------------------------------------------
# Tiled linear fused with bias + residual-add + LayerNorm (tn == full N)
# ---------------------------------------------------------------------------

def _linear_res_ln_kernel(x_ref, w_ref, b_ref, res_ref, g_ref, beta_ref,
                          o_ref, acc_ref, *, eps):
    k = pl.program_id(1)

    @pl.when(k == 0)
    def _():
        acc_ref[...] = jnp.zeros_like(acc_ref)

    acc_ref[...] += jnp.dot(
        x_ref[...].astype(jnp.bfloat16),
        w_ref[...].astype(jnp.bfloat16),
        preferred_element_type=jnp.float32,
    )

    @pl.when(k == pl.num_programs(1) - 1)
    def _():
        y = (acc_ref[...]
             + b_ref[...].astype(jnp.float32)
             + res_ref[...].astype(jnp.float32))
        mu = jnp.mean(y, axis=-1, keepdims=True)
        var = jnp.mean(jnp.square(y - mu), axis=-1, keepdims=True)
        y = (y - mu) * lax.rsqrt(var + eps)
        y = y * g_ref[...].astype(jnp.float32) + beta_ref[...].astype(jnp.float32)
        o_ref[...] = y.astype(o_ref.dtype)


def linear_residual_layernorm(x, w, b, residual, g, beta, eps=1e-12, out_dtype=ACT_DTYPE):
    M, K = x.shape
    N = w.shape[1]          # LayerNorm axis -> keep full N per output tile
    tm = _fit_tile(M, 256)
    tk = _fit_tile(K, 512)
    grid = (M // tm, K // tk)
    cost = pl.CostEstimate(
        flops=2 * M * N * K,
        transcendentals=0,
        bytes_accessed=int((M * K + K * N + 2 * M * N) * 2 + 3 * N * 4),
    )
    return pl.pallas_call(
        functools.partial(_linear_res_ln_kernel, eps=eps),
        out_shape=jax.ShapeDtypeStruct((M, N), out_dtype),
        grid=grid,
        in_specs=[
            pl.BlockSpec((tm, tk), lambda i, k: (i, k)),
            pl.BlockSpec((tk, N), lambda i, k: (k, 0)),
            pl.BlockSpec((1, N), lambda i, k: (0, 0)),
            pl.BlockSpec((tm, N), lambda i, k: (i, 0)),
            pl.BlockSpec((1, N), lambda i, k: (0, 0)),
            pl.BlockSpec((1, N), lambda i, k: (0, 0)),
        ],
        out_specs=pl.BlockSpec((tm, N), lambda i, k: (i, 0)),
        scratch_shapes=[pltpu.VMEM((tm, N), jnp.float32)],
        compiler_params=pltpu.CompilerParams(
            dimension_semantics=("parallel", "arbitrary"),
            vmem_limit_bytes=VMEM_LIMIT),
        cost_estimate=cost,
    )(x, w, b.reshape(1, N), residual, g.reshape(1, N), beta.reshape(1, N))


# ---------------------------------------------------------------------------
# Attention: one grid step per batch element, all heads, lane-dense (S, H) output
# ---------------------------------------------------------------------------

def _attention_kernel(qkv_ref, bias_ref, o_ref, *, num_heads, head_dim, scale):
    H = num_heads * head_dim
    qkv = qkv_ref[0]                           # (S, 3H) bf16, VMEM resident
    bias = bias_ref[0].astype(jnp.float32)     # (S,) additive -1e9 on padded keys

    ctx_heads = []
    for h in range(num_heads):                 # static unroll; head split stays in VMEM
        q = qkv[:, h * head_dim:(h + 1) * head_dim]
        k = qkv[:, H + h * head_dim:H + (h + 1) * head_dim]
        v = qkv[:, 2 * H + h * head_dim:2 * H + (h + 1) * head_dim]
        # q @ k^T via dot_general (contraction on last dims; no explicit transpose)
        s = lax.dot_general(q, k, (((1,), (1,)), ((), ())),
                            preferred_element_type=jnp.float32) * scale
        s = s + bias[None, :]
        s = s - jnp.max(s, axis=-1, keepdims=True)
        p = jnp.exp(s)
        p = p * pl.reciprocal(jnp.sum(p, axis=-1, keepdims=True), approx=True)
        ctx_heads.append(jnp.dot(p.astype(jnp.bfloat16), v,
                                 preferred_element_type=jnp.float32))
    o_ref[0] = jnp.concatenate(ctx_heads, axis=-1).astype(o_ref.dtype)


def attention(qkv, attn_bias, num_heads, head_dim, scale):
    B, S, H3 = qkv.shape
    H = num_heads * head_dim
    return pl.pallas_call(
        functools.partial(_attention_kernel, num_heads=num_heads,
                          head_dim=head_dim, scale=scale),
        out_shape=jax.ShapeDtypeStruct((B, S, H), qkv.dtype),
        grid=(B,),
        in_specs=[pl.BlockSpec((1, S, H3), lambda b: (b, 0, 0)),
                  pl.BlockSpec((1, S), lambda b: (b, 0))],
        out_specs=pl.BlockSpec((1, S, H), lambda b: (b, 0, 0)),
        compiler_params=pltpu.CompilerParams(
            dimension_semantics=("parallel",),
            vmem_limit_bytes=VMEM_LIMIT),
    )(qkv, attn_bias)


# ---------------------------------------------------------------------------
# Standalone LayerNorm (embeddings) — tiled over rows
# ---------------------------------------------------------------------------

def _layernorm_kernel(x_ref, g_ref, b_ref, o_ref, *, eps):
    x = x_ref[...].astype(jnp.float32)
    mu = jnp.mean(x, axis=-1, keepdims=True)
    var = jnp.mean(jnp.square(x - mu), axis=-1, keepdims=True)
    y = (x - mu) * lax.rsqrt(var + eps)
    o_ref[...] = (y * g_ref[...] + b_ref[...]).astype(o_ref.dtype)


def layernorm(x, g, b, eps=1e-12, out_dtype=ACT_DTYPE):
    M, H = x.shape
    tm = _fit_tile(M, 512)
    return pl.pallas_call(
        functools.partial(_layernorm_kernel, eps=eps),
        out_shape=jax.ShapeDtypeStruct((M, H), out_dtype),
        grid=(M // tm,),
        in_specs=[pl.BlockSpec((tm, H), lambda i: (i, 0)),
                  pl.BlockSpec((1, H), lambda i: (0, 0)),
                  pl.BlockSpec((1, H), lambda i: (0, 0))],
        out_specs=pl.BlockSpec((tm, H), lambda i: (i, 0)),
        compiler_params=pltpu.CompilerParams(
            dimension_semantics=("parallel",),
            vmem_limit_bytes=VMEM_LIMIT),
    )(x, g.reshape(1, H), b.reshape(1, H))


# ---------------------------------------------------------------------------
# Masked mean pooling + L2 normalize — tiled over batch
# ---------------------------------------------------------------------------

def _pool_l2norm_kernel(x_ref, m_ref, o_ref):
    x = x_ref[0].astype(jnp.float32)              # (S, H)
    m = m_ref[0].astype(jnp.float32)[:, None]     # (S, 1)
    summed = jnp.sum(x * m, axis=0, keepdims=True)            # (1, H)
    denom = jnp.maximum(jnp.sum(m, axis=0, keepdims=True), 1e-9)   # clamp(mask.sum, 1e-9)
    pooled = summed * pl.reciprocal(denom, approx=True)
    sumsq = jnp.sum(pooled * pooled, axis=-1, keepdims=True)  # (1, 1)
    # F.normalize(p=2, dim=1, eps=1e-12): x / max(||x||, 1e-12) == x * rsqrt(max(||x||^2, 1e-24))
    o_ref[...] = pooled * lax.rsqrt(jnp.maximum(sumsq, 1e-24))


def mean_pool_l2norm(x, mask_f):
    B, S, H = x.shape
    return pl.pallas_call(
        _pool_l2norm_kernel,
        out_shape=jax.ShapeDtypeStruct((B, H), jnp.float32),
        grid=(B,),
        in_specs=[pl.BlockSpec((1, S, H), lambda b: (b, 0, 0)),
                  pl.BlockSpec((1, S), lambda b: (b, 0))],
        out_specs=pl.BlockSpec((1, H), lambda b: (b, 0)),
        compiler_params=pltpu.CompilerParams(
            dimension_semantics=("parallel",),
            vmem_limit_bytes=VMEM_LIMIT),
    )(x, mask_f)


# ---------------------------------------------------------------------------
# Synthetic BERT-style encoder (parameters + forward glue)
# ---------------------------------------------------------------------------

def init_params(key, cfg):
    H, F, L = cfg["hidden"], cfg["ffn"], cfg["layers"]
    keys = jax.random.split(key, 3 + L)

    def nrm(k, shape, dtype=jnp.bfloat16):
        return (0.02 * jax.random.normal(k, shape, dtype=jnp.float32)).astype(dtype)

    params = {
        "word_emb": nrm(keys[0], (cfg["vocab_size"], H), jnp.float32),
        "pos_emb": nrm(keys[1], (cfg["max_pos"], H), jnp.float32),
        "type_emb": nrm(keys[2], (cfg["type_vocab"], H), jnp.float32),
        "emb_ln_g": jnp.ones((H,), jnp.float32),
        "emb_ln_b": jnp.zeros((H,), jnp.float32),
        "layers": [],
    }
    for l in range(L):
        lk = jax.random.split(keys[3 + l], 4)
        params["layers"].append({
            # fused QKV weight (H, 3H): one matmul per layer for q/k/v
            "w_qkv": nrm(lk[0], (H, 3 * H)), "b_qkv": jnp.zeros((3 * H,), jnp.float32),
            "wo": nrm(lk[1], (H, H)), "bo": jnp.zeros((H,), jnp.float32),
            "ln1_g": jnp.ones((H,), jnp.float32), "ln1_b": jnp.zeros((H,), jnp.float32),
            "w1": nrm(lk[2], (H, F)), "b1": jnp.zeros((F,), jnp.float32),
            "w2": nrm(lk[3], (F, H)), "b2": jnp.zeros((H,), jnp.float32),
            "ln2_g": jnp.ones((H,), jnp.float32), "ln2_b": jnp.zeros((H,), jnp.float32),
        })
    return params


def sentence_encoder_forward(params, cfg, ids, mask, token_type_ids=None):
    B, S = ids.shape
    H, nh = cfg["hidden"], cfg["heads"]
    hd = H // nh
    if token_type_ids is None:
        token_type_ids = jnp.zeros_like(ids)

    # TODO(synk): embedding lookups are data-dependent gathers; left to XLA glue.
    x = (jnp.take(params["word_emb"], ids, axis=0)
         + params["pos_emb"][:S][None, :, :]
         + jnp.take(params["type_emb"], token_type_ids, axis=0))
    x = layernorm(x.reshape(B * S, H), params["emb_ln_g"], params["emb_ln_b"])  # bf16

    mask_f = mask.astype(jnp.float32)
    attn_bias = (1.0 - mask_f) * (-1e9)     # precomputed additive attention bias (B, S)
    scale = 1.0 / float(hd) ** 0.5

    for lp in params["layers"]:
        qkv = linear(x, lp["w_qkv"], lp["b_qkv"])                 # (B*S, 3H) bf16, fused QKV
        ctx = attention(qkv.reshape(B, S, 3 * H), attn_bias, nh, hd, scale)   # (B, S, H)
        x = linear_residual_layernorm(ctx.reshape(B * S, H), lp["wo"], lp["bo"],
                                      x, lp["ln1_g"], lp["ln1_b"])
        h = linear(x, lp["w1"], lp["b1"], activation="gelu")
        x = linear_residual_layernorm(h, lp["w2"], lp["b2"],
                                      x, lp["ln2_g"], lp["ln2_b"])

    return mean_pool_l2norm(x.reshape(B, S, H), mask_f)           # (B, H), L2-normalized f32


def single_sbert_forward(params, cfg, inp, mode=None):
    """Mirrors single_sbert.forward semantics."""
    if mode is not None:
        return sentence_encoder_forward(
            params, cfg, inp["ids"], inp["mask"], inp["token_type_ids"])
    query = sentence_encoder_forward(
        params, cfg, inp["query"]["ids"], inp["query"]["mask"],
        inp["query"]["token_type_ids"])
    key = sentence_encoder_forward(
        params, cfg, inp["key"]["ids"], inp["key"]["mask"],
        inp["key"]["token_type_ids"])
    return {"key": key, "query": query}


# ---------------------------------------------------------------------------

if __name__ == "__main__":
    cfg = dict(vocab_size=100, max_pos=16, type_vocab=2,
               hidden=32, heads=2, layers=2, ffn=64)
    root = jax.random.PRNGKey(0)
    pkey, dkey = jax.random.split(root)
    params = init_params(pkey, cfg)

    B, S = 2, 8
    k1, k2 = jax.random.split(dkey)

    def make_inputs(k):
        ids = jax.random.randint(k, (B, S), 0, cfg["vocab_size"], dtype=jnp.int32)
        mask = jnp.array([[1] * S, [1] * (S - 3) + [0] * 3], dtype=jnp.int32)
        tks = jnp.zeros((B, S), dtype=jnp.int32)
        return {"ids": ids, "mask": mask, "token_type_ids": tks}

    inp = {"query": make_inputs(k1), "key": make_inputs(k2)}

    # paired mode (mode=None): returns {'key': ..., 'query': ...}
    out = single_sbert_forward(params, cfg, inp, mode=None)
    jax.block_until_ready(out)
    assert out["query"].shape == (B, cfg["hidden"])
    assert out["key"].shape == (B, cfg["hidden"])

    # single mode (mode='query')
    out_q = single_sbert_forward(params, cfg, inp["query"], mode="query")
    jax.block_until_ready(out_q)
    assert out_q.shape == (B, cfg["hidden"])

    print("KERNEL_OK")
</pallas_src>

<mosaic_0001>
module attributes {stable_mosaic.version = 11 : i64} {
  func.func @_layernorm_kernel(%arg0: i32, %arg1: memref<16x32xf32, #tpu.memory_space<vmem>>, %arg2: memref<1x32xf32, #tpu.memory_space<vmem>>, %arg3: memref<1x32xf32, #tpu.memory_space<vmem>>, %arg4: memref<16x32xbf16, #tpu.memory_space<vmem>>) attributes {dimension_semantics = [#tpu.dimension_semantics<parallel>], iteration_bounds = array<i64: 1>, scalar_prefetch = 0 : i64, scratch_operands = 0 : i64, tpu.core_type = #tpu.core_type<tc>, window_params = [{transform_indices = @transform_0, window_bounds = array<i64: 16, 32>}, {pipeline_mode = #tpu.pipeline_mode<synchronous>, transform_indices = @transform_1, window_bounds = array<i64: 1, 32>}, {pipeline_mode = #tpu.pipeline_mode<synchronous>, transform_indices = @transform_2, window_bounds = array<i64: 1, 32>}, {transform_indices = @transform_3, window_bounds = array<i64: 16, 32>}]} {
    %c0 = arith.constant 0 : index
    %c0_0 = arith.constant 0 : index
    %0 = vector.load %arg1[%c0, %c0_0] : memref<16x32xf32, #tpu.memory_space<vmem>>, vector<16x32xf32>
    %cst = arith.constant dense<0.000000e+00> : vector<16xf32>
    %1 = vector.multi_reduction <add>, %0, %cst [1] : vector<16x32xf32> to vector<16xf32>
    %2 = vector.shape_cast %1 : vector<16xf32> to vector<16x1xf32>
    %cst_1 = arith.constant 3.200000e+01 : f32
    %3 = vector.broadcast %cst_1 : f32 to vector<16x1xf32>
    %4 = arith.divf %2, %3 : vector<16x1xf32>
    %5 = vector.broadcast %4 : vector<16x1xf32> to vector<16x32xf32>
    %6 = arith.subf %0, %5 : vector<16x32xf32>
    %7 = arith.mulf %6, %6 : vector<16x32xf32>
    %cst_2 = arith.constant dense<0.000000e+00> : vector<16xf32>
    %8 = vector.multi_reduction <add>, %7, %cst_2 [1] : vector<16x32xf32> to vector<16xf32>
    %9 = vector.shape_cast %8 : vector<16xf32> to vector<16x1xf32>
    %cst_3 = arith.constant 3.200000e+01 : f32
    %10 = vector.broadcast %cst_3 : f32 to vector<16x1xf32>
    %11 = arith.divf %9, %10 : vector<16x1xf32>
    %12 = vector.broadcast %4 : vector<16x1xf32> to vector<16x32xf32>
    %13 = arith.subf %0, %12 : vector<16x32xf32>
    %cst_4 = arith.constant 9.99999996E-13 : f32
    %14 = vector.broadcast %cst_4 : f32 to vector<16x1xf32>
    %15 = arith.addf %11, %14 : vector<16x1xf32>
    %16 = math.rsqrt %15 : vector<16x1xf32>
    %17 = vector.broadcast %16 : vector<16x1xf32> to vector<16x32xf32>
    %18 = arith.mulf %13, %17 : vector<16x32xf32>
    %c0_5 = arith.constant 0 : index
    %c0_6 = arith.constant 0 : index
    %19 = vector.load %arg2[%c0_5, %c0_6] : memref<1x32xf32, #tpu.memory_space<vmem>>, vector<1x32xf32>
    %20 = vector.broadcast %19 : vector<1x32xf32> to vector<16x32xf32>
    %21 = arith.mulf %18, %20 : vector<16x32xf32>
    %c0_7 = arith.constant 0 : index
    %c0_8 = arith.constant 0 : index
    %22 = vector.load %arg3[%c0_7, %c0_8] : memref<1x32xf32, #tpu.memory_space<vmem>>, vector<1x32xf32>
    %23 = vector.broadcast %22 : vector<1x32xf32> to vector<16x32xf32>
    %24 = arith.addf %21, %23 : vector<16x32xf32>
    %25 = arith.truncf %24 : vector<16x32xf32> to vector<16x32xbf16>
    %c0_9 = arith.constant 0 : index
    %c0_10 = arith.constant 0 : index
    %26 = vector.load %arg4[%c0_9, %c0_10] : memref<16x32xbf16, #tpu.memory_space<vmem>>, vector<16x32xbf16>
    tpu.vector_store %arg4[%c0_9, %c0_10], %25 {strides = array<i32>} : memref<16x32xbf16, #tpu.memory_space<vmem>>, vector<16x32xbf16>,
    return
  }
  func.func @transform_0(%arg0: i32) -> (i32, i32) {
    %c0_i32 = arith.constant 0 : i32
    %c0_i32_0 = arith.constant 0 : i32
    return %arg0, %c0_i32 : i32, i32
  }
  func.func @transform_1(%arg0: i32) -> (i32, i32) {
    %c0_i32 = arith.constant 0 : i32
    %c0_i32_0 = arith.constant 0 : i32
    %c0_i32_1 = arith.constant 0 : i32
    return %c0_i32, %c0_i32_0 : i32, i32
  }
  func.func @transform_2(%arg0: i32) -> (i32, i32) {
    %c0_i32 = arith.constant 0 : i32
    %c0_i32_0 = arith.constant 0 : i32
    %c0_i32_1 = arith.constant 0 : i32
    return %c0_i32, %c0_i32_0 : i32, i32
  }
  func.func @transform_3(%arg0: i32) -> (i32, i32) {
    %c0_i32 = arith.constant 0 : i32
    %c0_i32_0 = arith.constant 0 : i32
    return %arg0, %c0_i32 : i32, i32
  }
}

</mosaic_0001>

<llo_original>
// kernel: tpu_custom_call.1
$region0: #{tpu_custom_call.1}
  #allocation0 [shape = 'u32[]', space=smem, size = 0x4, offset = 0x4, fixed_abs, tag = 'smem constant byte address 0x4 - core index']
  #allocation1 [shape = 'u32[72,128]{1,0:T(1,128)}', space=vmem, size = 0x9000, scoped, tag = 'internal scratch']
  %s0 = inlined_call_operand.hbm [shape: f32[16,32], index: 0, kind: input, shape index: {}]
  %s1 = inlined_call_operand.hbm [shape: f32[1,32], index: 1, kind: input, shape index: {}]
  %s2 = inlined_call_operand.vmem [shape: f32[1,32], index: 2, kind: input, shape index: {}]
  %s3 = inlined_call_operand.hbm [shape: bf16[16,32], index: 3, kind: output, shape index: {}]
  %s4 = sld [smem:[#allocation0]]
  $region30: #{tpu_custom_call.1} parent=0
    _
  %s6 = ssub.s32 1, %s4
  %s7 = scalar_select 0, %s6, %s4
  $region1: #{tpu_custom_call.1} parent=0
    #allocation2 [shape = 'u8[8192]{0}', space=vmem, size = 0x2000, scoped, tag = 'input window, operand 0, single buffered']
    #allocation3 [shape = 's32[1]{0}', space=sflag, size = 0x4, scoped, tag = 'scoped memory for tpu_custom_call.1']
    #allocation4 [shape = 's32[1]{0}', space=sflag, size = 0x4, scoped, tag = 'scoped memory for tpu_custom_call.1']
    #allocation5 [shape = 'u8[512]{0}', space=vmem, size = 0x400, scoped, tag = 'input window, operand 1, single buffered']
    #allocation6 [shape = 's32[1]{0}', space=sflag, size = 0x4, scoped, tag = 'scoped memory for tpu_custom_call.1']
    #allocation7 [shape = 'u8[4096]{0}', space=vmem, size = 0x1000, scoped, tag = 'output window, operand 0, single buffered']
    %8 = vsyncpa [#allocation3], 0
    %9 = vsyncpa [#allocation6], 0
    %10 = vsyncpa [#allocation4], 0
    // Predicated region
    $region2: #{tpu_custom_call.1} parent=1 // pred_check
      _
    $region3: #{tpu_custom_call.1} parent=1 // pred_check_branch
      %12 = sbr.rel (0) target = $region5
    $region4: #{tpu_custom_call.1} parent=1 // pred_region
      %14 = vsyncadd [#allocation3], 0
      %s15 = sshll.u32 %s0, 4
      %s16 = int_to_ptr.hbm [resolvable:$true] %s15
      %s17 = sshll.u32 [#allocation2], 4
      %s18 = int_to_ptr.vmem [resolvable:$true] %s17
      %23 = dma.hbm_to_vmem [thread:$0]  %s16, 256, %s18, [#allocation3], 128, 128, 8
    $region5: #{tpu_custom_call.1} parent=1 // pred_fallthru
      _
    // Predicated region
    $region6: #{tpu_custom_call.1} parent=1 // pred_check
      _
    $region7: #{tpu_custom_call.1} parent=1 // pred_check_branch
      %25 = sbr.rel (0) target = $region9
    $region8: #{tpu_custom_call.1} parent=1 // pred_region
      %27 = vsyncadd [#allocation6], 0
      %s29 = sshll.u32 %s1, 4
      %s30 = int_to_ptr.hbm [resolvable:$true] %s29
      %s31 = sshll.u32 [#allocation5], 4
      %s32 = int_to_ptr.vmem [resolvable:$true] %s31
      %34 = dma.hbm_to_vmem [thread:$0]  %s30, 16, %s32, [#allocation6]
    $region9: #{tpu_custom_call.1} parent=1 // pred_fallthru
      _
    // Predicated region
    $region10: #{tpu_custom_call.1} parent=1 // pred_check
      _
    $region11: #{tpu_custom_call.1} parent=1 // pred_check_branch
      %36 = sbr.rel (0) target = $region13
    $region12: #{tpu_custom_call.1} parent=1 // pred_region
      _
    $region13: #{tpu_custom_call.1} parent=1 // pred_fallthru
      _
    // Predicated region
    $region14: #{tpu_custom_call.1} parent=1 // pred_check
      _
    $region15: #{tpu_custom_call.1} parent=1 // pred_check_branch
      %38 = sbr.rel (0) target = $region17
    $region16: #{tpu_custom_call.1} parent=1 // pred_region
      %40 = dma.done [#allocation3], 256
    $region17: #{tpu_custom_call.1} parent=1 // pred_fallthru
      _
    // Predicated region
    $region18: #{tpu_custom_call.1} parent=1 // pred_check
      _
    $region19: #{tpu_custom_call.1} parent=1 // pred_check_branch
      %42 = sbr.rel (0) target = $region21
    $region20: #{tpu_custom_call.1} parent=1 // pred_region
      %44 = dma.done [#allocation6], 16
    $region21: #{tpu_custom_call.1} parent=1 // pred_fallthru
      _
    %v45 = vld [vmem:[#allocation2] sm:$0xff]
    %v46 = vld [vmem:[#allocation2 + $0x8] sm:$0xff]
    %vm47 = vcmask 261120
    %v48 = vsel %vm47, %v45, 0.0
    %49 = vadd.xlane.f32.xlu0 %v48
    %v50 = vpop.xlane.xlu0 %49
    %v51 = vsel %vm47, %v46, 0.0
    %52 = vadd.xlane.f32.xlu0 %v51
    %v53 = vpop.xlane.xlu0 %52
    %v54 = vrcp.pop 32.0
    %v55 = vmul.f32 32.0, %v54
    %v56 = vsub.f32 1.0, %v55
    %v57 = vmul.f32 %v54, %v56
    %v58 = vadd.f32 %v54, %v57
    %vm59 = vweird.f32 %v54
    %v60 = vsel %vm59, %v54, %v58
    %v61 = vmul.f32 %v50, %v60
    %v62 = vmul.f32 %v53, %v60
    %v63 = vsub.f32 %v45, %v61
    %v64 = vsub.f32 %v46, %v62
    %v65 = vmul.f32 %v63, %v63
    %v66 = vmul.f32 %v64, %v64
    %v67 = vsel %vm47, %v65, 0.0
    %68 = vadd.xlane.f32.xlu0 %v67
    %v69 = vpop.xlane.xlu0 %68
    %v70 = vsel %vm47, %v66, 0.0
    %71 = vadd.xlane.f32.xlu0 %v70
    %v72 = vpop.xlane.xlu0 %71
    %v73 = vmul.f32 %v69, %v60
    %v74 = vmul.f32 %v72, %v60
    %v75 = vadd.f32 %v73, 1e-12
    %v76 = vadd.f32 %v74, 1e-12
    %v77 = vrsqrt.pop %v75
    %v78 = vmul.f32 %v77, %v75
    %v79 = vmul.f32 %v78, %v77
    %v80 = vmul.f32 0.5, %v79
    %v81 = vsub.f32 1.5, %v80
    %v82 = vmul.f32 %v77, %v81
    %vm83 = vweird.f32 %v75
    %vm84 = vweird.f32 %v77
    %vm85 = vmor %vm83, %vm84
    %v86 = vsel %vm85, %v77, %v82
    %v87 = vrsqrt.pop %v76
    %v88 = vmul.f32 %v87, %v76
    %v89 = vmul.f32 %v88, %v87
    %v90 = vmul.f32 0.5, %v89
    %v91 = vsub.f32 1.5, %v90
    %v92 = vmul.f32 %v87, %v91
    %vm93 = vweird.f32 %v76
    %vm94 = vweird.f32 %v87
    %vm95 = vmor %vm93, %vm94
    %v96 = vsel %vm95, %v87, %v92
    %v97 = vmul.f32 %v63, %v86
    %v98 = vmul.f32 %v64, %v96
    %v99 = vld [vmem:[#allocation5] sm:$0x1]
    %v101 = vperm.slane %v99, 0
    %v103 = vmul.f32 %v97, %v101
    %v104 = vmul.f32 %v98, %v101
    %v105 = vld [vmem:[%s2] sm:$0x1]
    %v107 = vperm.slane %v105, 0
    %v109 = vadd.f32 %v103, %v107
    %v110 = vadd.f32 %v104, %v107
    %v111 = vpack.c.bf16 %v109, %v109
    %v112 = vpack.c.bf16 %v110, %v110
    %vm113 = vcmask 257024
    %114 = vst.msk [vmem:[#allocation7] sm:$0xf] %vm113, %v111
    %115 = vst.msk [vmem:[#allocation7 + $0x4] sm:$0xf] %vm113, %v112
    // Predicated region
    $region22: #{tpu_custom_call.1} parent=1 // pred_check
      _
    $region23: #{tpu_custom_call.1} parent=1 // pred_check_branch
      %117 = sbr.rel (0) target = $region25
    $region24: #{tpu_custom_call.1} parent=1 // pred_region
      %119 = vsyncadd [#allocation4], 0
      %s120 = sshll.u32 [#allocation7], 4
      %s121 = int_to_ptr.vmem [resolvable:$true] %s120
      %s122 = sshll.u32 %s3, 4
      %s123 = int_to_ptr.hbm [resolvable:$true] %s122
      %128 = dma.vmem_to_hbm [thread:$0]  %s121, 128, %s123, [#allocation4], 64, 64, 4
    $region25: #{tpu_custom_call.1} parent=1 // pred_fallthru
      _
    // Predicated region
    $region26: #{tpu_custom_call.1} parent=1 // pred_check
      _
    $region27: #{tpu_custom_call.1} parent=1 // pred_check_branch
      %130 = sbr.rel (0) target = $region29
    $region28: #{tpu_custom_call.1} parent=1 // pred_region
      %132 = dma.done [#allocation4], 128
    $region29: #{tpu_custom_call.1} parent=1 // pred_fallthru
      _
    %133 = vsyncpa [#allocation3], 1
    %134 = vsyncpa [#allocation6], 1
    %135 = vsyncpa [#allocation4], 1

</llo_original>
